<compile_context>
chip_gen: v7x
topology: tpu7x:2x2x1
jax: 0.10.0
libtpu: 0.0.40
codegen_flags: <defaults>
</compile_context>

<pallas_src>
import numpy as np
import jax
import jax.numpy as jnp
from jax.experimental import pallas as pl
from jax.experimental.pallas import tpu as pltpu

_LANE = 128
_MIN_CHUNK_BYTES = 512 * 1024  # never split the copy into chunks smaller than this


def _resolve_shape(b, f, shape):
    """Resolve torch-style view shape (at most one -1) against per-batch size f."""
    tgt = [int(s) for s in shape]
    neg = [i for i, s in enumerate(tgt) if s == -1]
    if len(neg) > 1:
        raise ValueError("View: only one dimension may be -1")
    if neg:
        known = 1
        for s in tgt:
            if s != -1:
                known *= s
        if known == 0 or f % known != 0:
            raise ValueError("View shape incompatible with input size")
        tgt[neg[0]] = f // known
    if int(np.prod(tgt, dtype=np.int64)) != f:
        raise ValueError("View shape incompatible with input size")
    return tuple([b] + tgt)


def _choose_layout(n, itemsize):
    """2D factorization (rows, cols) of the flat buffer: cols a multiple of 128
    (lane-dense), rows preferably a multiple of the dtype-aware sublane packing
    (32 // itemsize: 8 for f32, 16 for bf16, 32 for int8/fp8).  Falls back to a
    single contiguous row when n is not a multiple of 128 (a DMA copy has no
    (8,128) constraint, so this stays correct)."""
    sub = max(1, 32 // itemsize)
    for cols in (2048, 1024, 512, 256, 128):
        if n % cols == 0 and (n // cols) % sub == 0:
            return n // cols, cols
    for cols in (2048, 1024, 512, 256, 128):
        if n % cols == 0:
            return n // cols, cols
    return 1, n


def _choose_chunks(rows, row_bytes):
    """Number of equal row-chunks.  >=2 chunks lets the parallel grid feed both
    TensorCores on v7x; chunks always divide rows evenly (no masked tail) and
    never drop below _MIN_CHUNK_BYTES so per-step overhead stays <~1%."""
    for nc in (8, 4, 2):
        if rows % nc == 0 and (rows // nc) * row_bytes >= _MIN_CHUNK_BYTES:
            return nc
    return 1


def _make_hbm_copy_kernel(block_rows):
    def kernel(x_ref, o_ref, sem):
        # One large HBM->HBM DMA per grid step: purely DMA / HBM-bandwidth
        # bound, no VMEM bounce, each step owns a disjoint row slice.
        start = pl.multiple_of(pl.program_id(0) * block_rows, block_rows)
        cp = pltpu.make_async_copy(
            x_ref.at[pl.ds(start, block_rows)],
            o_ref.at[pl.ds(start, block_rows)],
            sem,
        )
        cp.start()
        cp.wait()

    return kernel


def pallas_view(x, *shape, materialize=False):
    """Equivalent of PyTorch View(*shape): out = x.view(x.shape[0], *shape).

    Default path is the metadata-only reshape (exact torch .view semantics and
    the fastest possible implementation).  materialize=True produces a fresh
    HBM buffer via a chunked HBM->HBM DMA Pallas kernel.
    """
    b = x.shape[0]
    f = int(np.prod(x.shape[1:], dtype=np.int64)) if x.ndim > 1 else 1
    out_shape = _resolve_shape(b, f, shape)

    if not materialize:
        # Metadata-only: strictly faster than any copy kernel.
        return x.reshape(out_shape)

    n = b * f
    itemsize = x.dtype.itemsize
    rows, cols = _choose_layout(n, itemsize)
    num_chunks = _choose_chunks(rows, cols * itemsize)
    block_rows = rows // num_chunks

    x2d = x.reshape(rows, cols)  # free (metadata only)

    out2d = pl.pallas_call(
        _make_hbm_copy_kernel(block_rows),
        out_shape=jax.ShapeDtypeStruct((rows, cols), x.dtype),
        grid_spec=pltpu.PrefetchScalarGridSpec(
            num_scalar_prefetch=0,
            grid=(num_chunks,),
            in_specs=[pl.BlockSpec(memory_space=pl.ANY)],
            out_specs=pl.BlockSpec(memory_space=pl.ANY),
            scratch_shapes=[pltpu.SemaphoreType.DMA],
        ),
        compiler_params=pltpu.CompilerParams(
            # Shards the (disjoint) chunk copies across both TensorCores on
            # v7x; no effect (and no cost) on single-TC v5e/v6e.
            dimension_semantics=("parallel",),
        ),
    )(x2d)

    return out2d.reshape(out_shape)


if __name__ == "__main__":
    key = jax.random.PRNGKey(0)

    # Small NCHW input, consistent with a conv-style pipeline feeding View.
    B, C, H, W = 2, 4, 16, 16
    x = jax.random.normal(key, (B, C, H, W), dtype=jnp.float32)

    ref = np.asarray(x).reshape(B, 16, 64)
    ref_flat = np.asarray(x).reshape(B, -1)

    # Default (fast) path: metadata-only reshape, exact torch .view semantics.
    out_fast = jax.block_until_ready(pallas_view(x, 16, 64))
    assert out_fast.shape == (B, 16, 64), out_fast.shape
    np.testing.assert_allclose(np.asarray(out_fast), ref, rtol=0, atol=0)

    # Pallas path: explicit materialized copy (single-chunk HBM->HBM DMA).
    out = jax.block_until_ready(pallas_view(x, 16, 64, materialize=True))
    assert out.shape == (B, 16, 64), out.shape
    np.testing.assert_allclose(np.asarray(out), ref, rtol=0, atol=0)

    # View(-1): exercise -1 resolution through the Pallas path.
    out2 = jax.block_until_ready(pallas_view(x, -1, materialize=True))
    assert out2.shape == (B, C * H * W), out2.shape
    np.testing.assert_allclose(np.asarray(out2), ref_flat, rtol=0, atol=0)

    # Moderate 2 MiB input to exercise the multi-chunk (grid > 1) DMA path
    # that feeds both TensorCores on v7x.
    xb = jax.random.normal(jax.random.PRNGKey(1), (2, 4, 128, 512), dtype=jnp.float32)
    refb = np.asarray(xb).reshape(2, 4 * 128 * 512)
    outb = jax.block_until_ready(pallas_view(xb, -1, materialize=True))
    assert outb.shape == (2, 4 * 128 * 512), outb.shape
    np.testing.assert_allclose(np.asarray(outb), refb, rtol=0, atol=0)

    print("KERNEL_OK")
</pallas_src>

<mosaic_0001>
module attributes {stable_mosaic.version = 11 : i64} {
  func.func @kernel(%arg0: i32, %arg1: memref<8x256xf32, #tpu.memory_space<any>>, %arg2: memref<8x256xf32, #tpu.memory_space<any>>, %arg3: memref<!tpu.dma_semaphore, #tpu.memory_space<semaphore_mem>>) attributes {dimension_semantics = [#tpu.dimension_semantics<parallel>], iteration_bounds = array<i64: 1>, scalar_prefetch = 0 : i64, scratch_operands = 1 : i64, tpu.core_type = #tpu.core_type<tc>, window_params = [{}, {}]} {
    %c8_i32 = arith.constant 8 : i32
    %0 = arith.muli %arg0, %c8_i32 : i32
    %1 = tpu.assume_multiple %0, 8 : i32
    %c0_i32 = arith.constant 0 : i32
    %2 = tpu.memref_slice %arg1[%1, %c0_i32] : memref<8x256xf32, #tpu.memory_space<any>> -> memref<8x256xf32, #tpu.memory_space<any>>
    %c0_i32_0 = arith.constant 0 : i32
    %3 = tpu.memref_slice %arg2[%1, %c0_i32_0] : memref<8x256xf32, #tpu.memory_space<any>> -> memref<8x256xf32, #tpu.memory_space<any>>
    tpu.enqueue_dma source(%2 : memref<8x256xf32, #tpu.memory_space<any>>) target(%3 : memref<8x256xf32, #tpu.memory_space<any>>) target_semaphore(%arg3 : memref<!tpu.dma_semaphore, #tpu.memory_space<semaphore_mem>>)
    %c0_i32_1 = arith.constant 0 : i32
    %4 = tpu.memref_slice %arg1[%1, %c0_i32_1] : memref<8x256xf32, #tpu.memory_space<any>> -> memref<8x256xf32, #tpu.memory_space<any>>
    %c0_i32_2 = arith.constant 0 : i32
    %5 = tpu.memref_slice %arg2[%1, %c0_i32_2] : memref<8x256xf32, #tpu.memory_space<any>> -> memref<8x256xf32, #tpu.memory_space<any>>
    tpu.wait_dma2 semaphore(%arg3 : memref<!tpu.dma_semaphore, #tpu.memory_space<semaphore_mem>>) src(%4 : memref<8x256xf32, #tpu.memory_space<any>>) dst(%5 : memref<8x256xf32, #tpu.memory_space<any>>)
    return
  }
}

</mosaic_0001>

<llo_original>
// kernel: tpu_custom_call.1
$region0: #{tpu_custom_call.1}
  #allocation0 [shape = 'u32[]', space=smem, size = 0x4, offset = 0x4, fixed_abs, tag = 'smem constant byte address 0x4 - core index']
  #allocation1 [shape = 'u32[144,128]{1,0:T(1,128)}', space=vmem, size = 0x12000, scoped, tag = 'internal scratch']
  #allocation2 [shape = 's32[1]{0}', space=sflag, size = 0x4, scoped, tag = 'scratch operand']
  #allocation3 [shape = 's32[]', space=sflag, size = 0x4, offset = 0, fixed_abs, tag = 'sflag constant byte address 0x0 - dummy sync flag']
  #allocation4 [shape = 'u32[0]{0}', space=smem, size = 0, offset = 0, fixed_abs, tag = 'smem constant byte address 0x0 - null']
  %s0 = inlined_call_operand.hbm [shape: f32[8,256], index: 0, kind: input, shape index: {}]
  %s1 = inlined_call_operand.hbm [shape: f32[8,256], index: 1, kind: output, shape index: {}]
  %s2 = sld [smem:[#allocation0]]
  $region2: #{tpu_custom_call.1} parent=0
    _
  %s4 = ssub.s32 1, %s2
  %s5 = scalar_select 0, %s4, %s2
  %s6 = smul.u32 0, 8
  %s7 = sshra.s32 %s6, 3
  %s8 = sand.u32 %s6, 7
  %s9 = smul.u32 %s7, 2
  %s10 = smul.addr %s9, 128
  %s11 = scalar_lea.hbm %s0, %s10
  %s12 = smul.addr %s9, 128
  %s13 = scalar_lea.hbm %s1, %s12
  %s15 = sshll.u32 1, 14
  %s16 = sxor.u32 4294967295, %s15
  %s19 = sshll.u32 3, 24
  %s20 = sxor.u32 4294967295, %s19
  %s21 = sand.u32 0, %s20
  %s23 = sor.u32 %s21, 0
  %26 = dma.general %s11, 256, %s13, [#allocation2], [#allocation3], [#allocation4], %s23, 0
  %s27 = smul.u32 8, 1
  %s28 = smul.u32 %s27, 2
  %s29 = sshll.u32 %s28, 4
  %30 = dma.done [#allocation2], %s29
  %31 = vsyncmov [#allocation2]
  %s32 = vpop.sfrf %31
  %p33 = scmp.eq.s32.totalorder %s32, 0
  %p34 = pneg %p33
  %36 = shalt.err (%p34)

</llo_original>
